<compile_context>
chip_gen: v5e
topology: v5e:2x2
jax: 0.10.0
libtpu: 0.0.40
codegen_flags: <defaults>
</compile_context>

<pallas_src>
import functools

import jax
import jax.numpy as jnp
from jax.experimental import pallas as pl
from jax.experimental.pallas import tpu as pltpu

_LANES = 128
_SUBLANE_ALIGN = 16  # multiple of both the f32 (8) and bf16 (16) sublane tiles


def _siamese_loss_kernel(o1_ref, o2_ref, out_ref, *, margin, inv_n):
    # Grid = (splits, steps); axis 1 is the reduction axis — the output block
    # index is constant along it, so out_ref stays resident in VMEM.
    i = pl.program_id(1)

    @pl.when(i == 0)
    def _():
        out_ref[...] = jnp.zeros_like(out_ref)

    a = o1_ref[...].astype(jnp.float32)
    b = o2_ref[...].astype(jnp.float32)
    hinge = jnp.maximum(margin - jnp.abs(a - b), 0.0)  # clamp(margin - dis, 0)

    # Fold the (tile_rows, 128) tile into an (8, 128) vreg-shaped partial sum
    # with pure VPU adds (no XLU cross-lane reduce inside the hot loop).
    out_ref[...] += hinge.reshape(-1, 8, _LANES).sum(axis=0)

    # Finalize this split's partial: scale by 1/N so the wrapper only sums.
    @pl.when(i == pl.num_programs(1) - 1)
    def _():
        out_ref[...] = out_ref[...] * inv_n


def efficient_siamese_loss(output1, output2, margin=10.0, *, tile_rows=1024):
    """Mean hinge loss: mean(clamp(margin - |output1 - output2|, min=0))."""
    assert output1.shape == output2.shape, "inputs must have identical shapes"
    n = output1.size
    margin = float(margin)

    # Flatten to 1-D; keep the native dtype (upcast happens inside the kernel).
    o1 = output1.reshape(-1)
    o2 = output2.reshape(-1)

    # Lay out as a lane-dense (rows, 128) slab, sublane-aligned.
    rows = pl.cdiv(n, _LANES)
    rows = pl.cdiv(rows, _SUBLANE_ALIGN) * _SUBLANE_ALIGN

    # Tile rows: big tiles, aligned to 16 sublanes, never bigger than needed.
    tile_rows = max(
        _SUBLANE_ALIGN, (min(int(tile_rows), rows) // _SUBLANE_ALIGN) * _SUBLANE_ALIGN
    )
    num_tiles = pl.cdiv(rows, tile_rows)

    # Two-way split over the leading parallel axis (both v7x TensorCores);
    # splits=1 for tiny inputs so the demo runs grid=(1, 1).
    splits = 2 if num_tiles >= 2 else 1
    num_tiles = pl.cdiv(num_tiles, splits) * splits
    steps = num_tiles // splits
    rows = num_tiles * tile_rows
    padded = rows * _LANES

    if padded != n:
        pad = padded - n
        # Padding contributes exactly zero: |0 - pad_val| > margin
        #   =>  clamp(margin - |diff|, min=0) == 0.
        pad_val = 2.0 * abs(margin) + 1.0
        o1 = jnp.concatenate([o1, jnp.zeros((pad,), o1.dtype)])
        o2 = jnp.concatenate([o2, jnp.full((pad,), pad_val, o2.dtype)])

    o1 = o1.reshape(rows, _LANES)
    o2 = o2.reshape(rows, _LANES)

    kernel = functools.partial(
        _siamese_loss_kernel, margin=margin, inv_n=1.0 / float(n)
    )

    partials = pl.pallas_call(
        kernel,
        out_shape=jax.ShapeDtypeStruct((splits * 8, _LANES), jnp.float32),
        grid_spec=pltpu.PrefetchScalarGridSpec(
            num_scalar_prefetch=0,
            grid=(splits, steps),
            in_specs=[
                pl.BlockSpec((tile_rows, _LANES), lambda s, i: (s * steps + i, 0)),
                pl.BlockSpec((tile_rows, _LANES), lambda s, i: (s * steps + i, 0)),
            ],
            out_specs=pl.BlockSpec((8, _LANES), lambda s, i: (s, 0)),
        ),
        compiler_params=pltpu.CompilerParams(
            dimension_semantics=("parallel", "arbitrary"),
        ),
    )(o1, o2)

    # Single cheap cross-lane collapse (<= 2 KiB) outside the hot loop.
    return jnp.sum(partials)


if __name__ == "__main__":
    key = jax.random.PRNGKey(0)
    k1, k2 = jax.random.split(key)

    # Siamese-network score outputs: (batch, features) = (16, 128)
    output1 = jax.random.normal(k1, (16, 128), dtype=jnp.float32) * 5.0
    output2 = jax.random.normal(k2, (16, 128), dtype=jnp.float32) * 5.0

    loss = efficient_siamese_loss(output1, output2, margin=10.0)
    loss = jax.block_until_ready(loss)

    # Pure-JAX reference of the exact PyTorch semantics.
    ref = jnp.mean(jnp.maximum(10.0 - jnp.abs(output1 - output2), 0.0))
    assert jnp.allclose(loss, ref, rtol=1e-5, atol=1e-6), (loss, ref)

    # Ragged / unaligned shape exercises the padding path (padding must
    # contribute exactly zero to the mean).
    r1 = jax.random.normal(k1, (5, 37), dtype=jnp.float32) * 5.0
    r2 = jax.random.normal(k2, (5, 37), dtype=jnp.float32) * 5.0
    loss2 = jax.block_until_ready(efficient_siamese_loss(r1, r2, margin=10.0))
    ref2 = jnp.mean(jnp.maximum(10.0 - jnp.abs(r1 - r2), 0.0))
    assert jnp.allclose(loss2, ref2, rtol=1e-5, atol=1e-6), (loss2, ref2)

    # bf16 inputs exercise the in-kernel upcast path.
    b1 = (jax.random.normal(k1, (8, 64)) * 5.0).astype(jnp.bfloat16)
    b2 = (jax.random.normal(k2, (8, 64)) * 5.0).astype(jnp.bfloat16)
    loss3 = jax.block_until_ready(efficient_siamese_loss(b1, b2, margin=10.0))
    ref3 = jnp.mean(
        jnp.maximum(
            10.0 - jnp.abs(b1.astype(jnp.float32) - b2.astype(jnp.float32)), 0.0
        )
    )
    assert jnp.allclose(loss3, ref3, rtol=1e-2, atol=1e-3), (loss3, ref3)

    print("KERNEL_OK")
</pallas_src>

<mosaic_0001>
module attributes {stable_mosaic.version = 11 : i64} {
  func.func @_siamese_loss_kernel(%arg0: i32, %arg1: i32, %arg2: memref<16x128xf32, #tpu.memory_space<vmem>>, %arg3: memref<16x128xf32, #tpu.memory_space<vmem>>, %arg4: memref<8x128xf32, #tpu.memory_space<vmem>>) attributes {dimension_semantics = [#tpu.dimension_semantics<parallel>, #tpu.dimension_semantics<arbitrary>], iteration_bounds = array<i64: 1, 1>, scalar_prefetch = 0 : i64, scratch_operands = 0 : i64, tpu.core_type = #tpu.core_type<tc>, window_params = [{transform_indices = @transform_0, window_bounds = array<i64: 16, 128>}, {transform_indices = @transform_1, window_bounds = array<i64: 16, 128>}, {transform_indices = @transform_2, window_bounds = array<i64: 8, 128>}]} {
    %c0_i32 = arith.constant 0 : i32
    %0 = arith.cmpi eq, %arg1, %c0_i32 : i32
    %1 = arith.extui %0 : i1 to i32
    %c0_i32_0 = arith.constant 0 : i32
    %2 = arith.cmpi ne, %1, %c0_i32_0 : i32
    scf.if %2 {
      %cst_12 = arith.constant 0.000000e+00 : f32
      %19 = vector.broadcast %cst_12 : f32 to vector<8x128xf32>
      %c0_13 = arith.constant 0 : index
      %c0_14 = arith.constant 0 : index
      %20 = vector.load %arg4[%c0_13, %c0_14] : memref<8x128xf32, #tpu.memory_space<vmem>>, vector<8x128xf32>
      tpu.vector_store %arg4[%c0_13, %c0_14], %19 {strides = array<i32>} : memref<8x128xf32, #tpu.memory_space<vmem>>, vector<8x128xf32>,
    } else {
    }
    %c0 = arith.constant 0 : index
    %c0_1 = arith.constant 0 : index
    %3 = vector.load %arg2[%c0, %c0_1] : memref<16x128xf32, #tpu.memory_space<vmem>>, vector<16x128xf32>
    %c0_2 = arith.constant 0 : index
    %c0_3 = arith.constant 0 : index
    %4 = vector.load %arg3[%c0_2, %c0_3] : memref<16x128xf32, #tpu.memory_space<vmem>>, vector<16x128xf32>
    %5 = arith.subf %3, %4 : vector<16x128xf32>
    %6 = math.absf %5 : vector<16x128xf32>
    %cst = arith.constant 1.000000e+01 : f32
    %7 = vector.broadcast %cst : f32 to vector<16x128xf32>
    %8 = arith.subf %7, %6 : vector<16x128xf32>
    %cst_4 = arith.constant 0.000000e+00 : f32
    %9 = vector.broadcast %cst_4 : f32 to vector<16x128xf32>
    %10 = arith.maximumf %8, %9 : vector<16x128xf32>
    %c0_5 = arith.constant 0 : index
    %c0_6 = arith.constant 0 : index
    %11 = vector.load %arg4[%c0_5, %c0_6] : memref<8x128xf32, #tpu.memory_space<vmem>>, vector<8x128xf32>
    %12 = vector.shape_cast %10 : vector<16x128xf32> to vector<2x8x128xf32>
    %cst_7 = arith.constant dense<0.000000e+00> : vector<8x128xf32>
    %13 = vector.multi_reduction <add>, %12, %cst_7 [0] : vector<2x8x128xf32> to vector<8x128xf32>
    %14 = arith.addf %11, %13 : vector<8x128xf32>
    %c0_8 = arith.constant 0 : index
    %c0_9 = arith.constant 0 : index
    %15 = vector.load %arg4[%c0_8, %c0_9] : memref<8x128xf32, #tpu.memory_space<vmem>>, vector<8x128xf32>
    tpu.vector_store %arg4[%c0_8, %c0_9], %14 {strides = array<i32>} : memref<8x128xf32, #tpu.memory_space<vmem>>, vector<8x128xf32>,
    %c0_i32_10 = arith.constant 0 : i32
    %16 = arith.cmpi eq, %arg1, %c0_i32_10 : i32
    %17 = arith.extui %16 : i1 to i32
    %c0_i32_11 = arith.constant 0 : i32
    %18 = arith.cmpi ne, %17, %c0_i32_11 : i32
    scf.if %18 {
      %c0_12 = arith.constant 0 : index
      %c0_13 = arith.constant 0 : index
      %19 = vector.load %arg4[%c0_12, %c0_13] : memref<8x128xf32, #tpu.memory_space<vmem>>, vector<8x128xf32>
      %cst_14 = arith.constant 4.8828125E-4 : f32
      %20 = vector.broadcast %cst_14 : f32 to vector<8x128xf32>
      %21 = arith.mulf %19, %20 : vector<8x128xf32>
      %c0_15 = arith.constant 0 : index
      %c0_16 = arith.constant 0 : index
      %22 = vector.load %arg4[%c0_15, %c0_16] : memref<8x128xf32, #tpu.memory_space<vmem>>, vector<8x128xf32>
      tpu.vector_store %arg4[%c0_15, %c0_16], %21 {strides = array<i32>} : memref<8x128xf32, #tpu.memory_space<vmem>>, vector<8x128xf32>,
    } else {
    }
    return
  }
  func.func @transform_0(%arg0: i32, %arg1: i32) -> (i32, i32) {
    %c1_i32 = arith.constant 1 : i32
    %0 = arith.muli %arg0, %c1_i32 : i32
    %1 = arith.addi %0, %arg1 : i32
    %c0_i32 = arith.constant 0 : i32
    %c0_i32_0 = arith.constant 0 : i32
    return %1, %c0_i32 : i32, i32
  }
  func.func @transform_1(%arg0: i32, %arg1: i32) -> (i32, i32) {
    %c1_i32 = arith.constant 1 : i32
    %0 = arith.muli %arg0, %c1_i32 : i32
    %1 = arith.addi %0, %arg1 : i32
    %c0_i32 = arith.constant 0 : i32
    %c0_i32_0 = arith.constant 0 : i32
    return %1, %c0_i32 : i32, i32
  }
  func.func @transform_2(%arg0: i32, %arg1: i32) -> (i32, i32) {
    %c0_i32 = arith.constant 0 : i32
    %c0_i32_0 = arith.constant 0 : i32
    return %arg0, %c0_i32 : i32, i32
  }
}

</mosaic_0001>

<llo_original>
// kernel: tpu_custom_call.1
$region0: #{tpu_custom_call.1}
  #allocation0 [shape = 'u32[]', space=smem, size = 0x4, offset = 0x4, fixed_abs, tag = 'smem constant byte address 0x4 - core index']
  #allocation1 [shape = 'u32[72,128]{1,0:T(1,128)}', space=vmem, size = 0x9000, scoped, tag = 'internal scratch']
  %s0 = inlined_call_operand.hbm [shape: f32[16,128], index: 0, kind: input, shape index: {}]
  %s1 = inlined_call_operand.hbm [shape: f32[16,128], index: 1, kind: input, shape index: {}]
  %s2 = inlined_call_operand.hbm [shape: f32[8,128], index: 2, kind: output, shape index: {}]
  %s3 = sld [smem:[#allocation0]]
  $region34: #{tpu_custom_call.1} parent=0
    _
  %s5 = ssub.s32 1, %s3
  %s6 = scalar_select 0, %s5, %s3
  $region1: #{tpu_custom_call.1} parent=0
    #allocation2 [shape = 'u8[8192]{0}', space=vmem, size = 0x2000, scoped, tag = 'input window, operand 0, single buffered']
    #allocation3 [shape = 's32[1]{0}', space=sflag, size = 0x4, scoped, tag = 'scoped memory for tpu_custom_call.1']
    #allocation4 [shape = 's32[1]{0}', space=sflag, size = 0x4, scoped, tag = 'scoped memory for tpu_custom_call.1']
    #allocation5 [shape = 'u8[8192]{0}', space=vmem, size = 0x2000, scoped, tag = 'input window, operand 1, single buffered']
    #allocation6 [shape = 's32[1]{0}', space=sflag, size = 0x4, scoped, tag = 'scoped memory for tpu_custom_call.1']
    #allocation7 [shape = 'u8[4096]{0}', space=vmem, size = 0x1000, scoped, tag = 'output window, operand 0, single buffered']
    %7 = vsyncpa [#allocation3], 0
    %8 = vsyncpa [#allocation6], 0
    %9 = vsyncpa [#allocation4], 0
    // Predicated region
    $region2: #{tpu_custom_call.1} parent=1 // pred_check
      _
    $region3: #{tpu_custom_call.1} parent=1 // pred_check_branch
      %11 = sbr.rel (0) target = $region5
    $region4: #{tpu_custom_call.1} parent=1 // pred_region
      %s12 = sadd.s32 0, 0
      %s13 = smul.u32 2, %s12
      %15 = vsyncadd [#allocation3], 0
      %s16 = smul.addr %s13, 8
      %s17 = scalar_lea.hbm %s0, %s16
      %s18 = sshll.u32 %s17, 4
      %s19 = int_to_ptr.hbm [resolvable:$true] %s18
      %s20 = sshll.u32 [#allocation2], 4
      %s21 = int_to_ptr.vmem [resolvable:$true] %s20
      %26 = dma.hbm_to_vmem [thread:$0]  %s19, 256, %s21, [#allocation3], 128, 128, 8
    $region5: #{tpu_custom_call.1} parent=1 // pred_fallthru
      _
    // Predicated region
    $region6: #{tpu_custom_call.1} parent=1 // pred_check
      _
    $region7: #{tpu_custom_call.1} parent=1 // pred_check_branch
      %28 = sbr.rel (0) target = $region9
    $region8: #{tpu_custom_call.1} parent=1 // pred_region
      %s29 = sadd.s32 0, 0
      %s30 = smul.u32 2, %s29
      %32 = vsyncadd [#allocation6], 0
      %s33 = smul.addr %s30, 8
      %s34 = scalar_lea.hbm %s1, %s33
      %s35 = sshll.u32 %s34, 4
      %s36 = int_to_ptr.hbm [resolvable:$true] %s35
      %s37 = sshll.u32 [#allocation5], 4
      %s38 = int_to_ptr.vmem [resolvable:$true] %s37
      %43 = dma.hbm_to_vmem [thread:$0]  %s36, 256, %s38, [#allocation6], 128, 128, 8
    $region9: #{tpu_custom_call.1} parent=1 // pred_fallthru
      _
    // Predicated region
    $region10: #{tpu_custom_call.1} parent=1 // pred_check
      _
    $region11: #{tpu_custom_call.1} parent=1 // pred_check_branch
      %45 = sbr.rel (0) target = $region13
    $region12: #{tpu_custom_call.1} parent=1 // pred_region
      %47 = dma.done [#allocation3], 256
    $region13: #{tpu_custom_call.1} parent=1 // pred_fallthru
      _
    // Predicated region
    $region14: #{tpu_custom_call.1} parent=1 // pred_check
      _
    $region15: #{tpu_custom_call.1} parent=1 // pred_check_branch
      %49 = sbr.rel (0) target = $region17
    $region16: #{tpu_custom_call.1} parent=1 // pred_region
      %51 = dma.done [#allocation6], 256
    $region17: #{tpu_custom_call.1} parent=1 // pred_fallthru
      _
    %s52 = sadd.s32 0, 0
    %s53 = smul.u32 2, %s52
    %s54 = sadd.s32 0, 0
    %s55 = smul.u32 2, %s54
    %p56 = scmp.eq.s32.totalorder 0, 0
    // Predicated region
    $region18: #{tpu_custom_call.1} parent=1 // pred_check
      %p57 = pneg %p56
    $region19: #{tpu_custom_call.1} parent=1 // pred_check_branch
      %59 = sbr.rel (%p57) target = $region21
    $region20: #{tpu_custom_call.1} parent=1 // pred_region
      %60 = vst [vmem:[#allocation7] sm:$0xff] 0.0
    $region21: #{tpu_custom_call.1} parent=1 // pred_fallthru
      _
    %v61 = vld [vmem:[#allocation2] sm:$0xff]
    %v62 = vld [vmem:[#allocation2 + $0x8] sm:$0xff]
    %v63 = vld [vmem:[#allocation5] sm:$0xff]
    %v64 = vld [vmem:[#allocation5 + $0x8] sm:$0xff]
    %v65 = vsub.f32 %v61, %v63
    %v66 = vsub.f32 %v62, %v64
    %v67 = vand.u32 2147483647, %v65
    %v68 = vand.u32 2147483647, %v66
    %v69 = vsub.f32 10.0, %v67
    %v70 = vsub.f32 10.0, %v68
    %v71 = vmax.f32 %v69, 0.0
    %v72 = vmax.f32 %v70, 0.0
    %v73 = vld [vmem:[#allocation7] sm:$0xff]
    %v74 = vadd.f32 %v71, %v72
    %v75 = vadd.f32 %v73, %v74
    %76 = vst [vmem:[#allocation7] sm:$0xff] %v75
    // Predicated region
    $region22: #{tpu_custom_call.1} parent=1 // pred_check
      %p77 = pneg %p56
    $region23: #{tpu_custom_call.1} parent=1 // pred_check_branch
      %79 = sbr.rel (%p77) target = $region25
    $region24: #{tpu_custom_call.1} parent=1 // pred_region
      %v80 = vld [vmem:[#allocation7] sm:$0xff]
      %v81 = vmul.f32 %v80, 0.00048828125
      %82 = vst [vmem:[#allocation7] sm:$0xff] %v81
    $region25: #{tpu_custom_call.1} parent=1 // pred_fallthru
      _
    // Predicated region
    $region26: #{tpu_custom_call.1} parent=1 // pred_check
      _
    $region27: #{tpu_custom_call.1} parent=1 // pred_check_branch
      %84 = sbr.rel (0) target = $region29
    $region28: #{tpu_custom_call.1} parent=1 // pred_region
      %86 = vsyncadd [#allocation4], 0
      %s88 = sshll.u32 [#allocation7], 4
      %s89 = int_to_ptr.vmem [resolvable:$true] %s88
      %s90 = sshll.u32 %s2, 4
      %s91 = int_to_ptr.hbm [resolvable:$true] %s90
      %93 = dma.vmem_to_hbm [thread:$0]  %s89, 128, %s91, [#allocation4]
    $region29: #{tpu_custom_call.1} parent=1 // pred_fallthru
      _
    // Predicated region
    $region30: #{tpu_custom_call.1} parent=1 // pred_check
      _
    $region31: #{tpu_custom_call.1} parent=1 // pred_check_branch
      %95 = sbr.rel (0) target = $region33
    $region32: #{tpu_custom_call.1} parent=1 // pred_region
      %97 = dma.done [#allocation4], 128
    $region33: #{tpu_custom_call.1} parent=1 // pred_fallthru
      _
    %98 = vsyncpa [#allocation3], 1
    %99 = vsyncpa [#allocation6], 1
    %100 = vsyncpa [#allocation4], 1

</llo_original>
